<compile_context>
chip_gen: v7x
topology: tpu7x:2x2x1
jax: 0.10.0
libtpu: 0.0.40
codegen_flags: <defaults>
</compile_context>

<pallas_src>
import functools

import jax
import jax.numpy as jnp
from jax import lax
from jax.experimental import pallas as pl
from jax.experimental.pallas import tpu as pltpu

# Sublane packing per element size: f32 -> 8 rows / vreg, bf16 -> 16, int8/fp8 -> 32.
_SUBLANE = {4: 8, 2: 16, 1: 32}


def _ls_ce_kernel(x_ref, t_ref, out_ref, m_ref, l_ref, sx_ref, xt_ref, *,
                  smoothing: float, c_total: int, mask_cols: bool):
    """One (row-tile, class-chunk) step.

    Maintains per-row online logsumexp state plus sum(x) and x[target] accumulators
    across class chunks; writes the per-row label-smoothed loss at the last chunk.
    """
    j = pl.program_id(1)

    @pl.when(j == 0)
    def _init():
        m_ref[...] = jnp.full(m_ref.shape, -jnp.inf, dtype=jnp.float32)
        l_ref[...] = jnp.zeros(l_ref.shape, dtype=jnp.float32)
        sx_ref[...] = jnp.zeros(sx_ref.shape, dtype=jnp.float32)
        xt_ref[...] = jnp.zeros(xt_ref.shape, dtype=jnp.float32)

    x = x_ref[...].astype(jnp.float32)                 # (tn, cc) upcast in-kernel
    tgt = t_ref[...]                                   # (tn, 1) int32
    tn, cc = x.shape

    # (1, cc) iota broadcast against the (tn, 1) target: no (tn, cc) int32 temporary.
    col = j * cc + lax.broadcasted_iota(jnp.int32, (1, cc), dimension=1)

    if mask_cols:                                      # only for a ragged last class chunk
        valid = col < c_total
        x_max_src = jnp.where(valid, x, -jnp.inf)
        x_sum_src = jnp.where(valid, x, 0.0)
    else:
        x_max_src = x
        x_sum_src = x

    # Online (flash-style) logsumexp over class chunks.
    m_prev = m_ref[...]
    m_new = jnp.maximum(m_prev, jnp.max(x_max_src, axis=-1, keepdims=True))
    alpha = jnp.exp(m_prev - m_new)
    p_sum = jnp.sum(jnp.exp(x_max_src - m_new), axis=-1, keepdims=True)
    l_ref[...] = alpha * l_ref[...] + p_sum
    m_ref[...] = m_new

    # Raw-x accumulators: class sum (for the mean term) and the target gather.
    sx_ref[...] += jnp.sum(x_sum_src, axis=-1, keepdims=True)
    xt_ref[...] += jnp.sum(jnp.where(col == tgt, x, 0.0), axis=-1, keepdims=True)

    @pl.when(j == pl.num_programs(1) - 1)
    def _finalize():
        lse = m_ref[...] + jnp.log(l_ref[...])         # full per-row logsumexp
        # loss_row = lse - confidence * x[target] - smoothing * mean(x)
        loss = (lse
                - (1.0 - smoothing) * xt_ref[...]
                - smoothing * (sx_ref[...] * (1.0 / c_total)))
        out_ref[...] = loss                            # ragged-row overhang is clipped on writeback


def _vmem_limit_bytes() -> int:
    """Generation-aware scoped-VMEM limit: ~48MiB on v7x (64MiB/TC), up to 96MiB on v5e/v6e."""
    try:
        cap = pltpu.get_tpu_info().vmem_capacity_bytes
    except Exception:
        cap = 64 * 1024 * 1024                         # conservative (v7x per-TC VMEM)
    return max(32 * 1024 * 1024, min(96 * 1024 * 1024, int(0.75 * cap)))


def _choose_tiles(n: int, c: int, itemsize: int, vmem_limit: int):
    """Pick (tile_n, chunk_c) so 2x double-buffered input tile + ~3 live f32 temporaries
    stay within ~60% of the VMEM limit (headroom for compiler scratch / pipeline)."""
    sub = _SUBLANE.get(itemsize, 8)
    budget = int(0.6 * vmem_limit)
    per_elem = 2 * itemsize + 3 * 4                    # 2-deep input buffers + ~3 f32 temps

    chunk_c = c
    rows = budget // max(1, chunk_c * per_elem)
    if rows < 2 * sub and c > 2048:
        # Vocab-scale C: chunk the class axis (online lse) so temporaries stay bounded
        # and tile_n stays large enough to hide DMA.
        chunk_c = 2048
        rows = budget // (chunk_c * per_elem)
    rows = max(sub, rows)
    tile_n = n if rows >= n else max(sub, (rows // sub) * sub)
    return tile_n, chunk_c


def label_smoothing_cross_entropy(x, target, smoothing: float = 0.1,
                                  tile_n: int | None = None,
                                  chunk_c: int | None = None):
    """x: [N, C] float (any dtype), target: [N] int -> scalar float32 loss."""
    n, c = x.shape
    itemsize = jnp.dtype(x.dtype).itemsize
    vmem_limit = _vmem_limit_bytes()

    auto_tn, auto_cc = _choose_tiles(n, c, itemsize, vmem_limit)
    if tile_n is None:
        tile_n = auto_tn
    if chunk_c is None:
        chunk_c = auto_cc

    tile_n = min(tile_n, n)
    if tile_n < n:
        tile_n = max(8, (tile_n // 8) * 8)             # sublane-aligned unless full block
    chunk_c = min(chunk_c, c)
    if chunk_c < c:
        assert chunk_c % 128 == 0, "chunk_c must be lane-aligned (multiple of 128)"
    mask_cols = (c % chunk_c) != 0                     # ragged last class chunk needs masking

    grid = (pl.cdiv(n, tile_n), pl.cdiv(c, chunk_c))   # rows parallel, classes = reduction (last)

    t2d = target.astype(jnp.int32).reshape(n, 1)

    cost = pl.CostEstimate(
        flops=8 * n * c,
        transcendentals=n * c + 2 * n,
        bytes_accessed=n * c * itemsize + n * 4 + n * 4,
    )

    # TODO(synk): sweep pipeline_mode=pl.Buffered(3) on the x BlockSpec if a profile at
    # the chosen tile shows exposed DMA and the VMEM budget has headroom.
    per_row = pl.pallas_call(
        functools.partial(_ls_ce_kernel, smoothing=float(smoothing),
                          c_total=c, mask_cols=mask_cols),
        out_shape=jax.ShapeDtypeStruct((n, 1), jnp.float32),
        grid_spec=pltpu.PrefetchScalarGridSpec(
            num_scalar_prefetch=0,
            grid=grid,
            in_specs=[
                pl.BlockSpec((tile_n, chunk_c), lambda i, j: (i, j)),
                pl.BlockSpec((tile_n, 1), lambda i, j: (i, 0)),
            ],
            out_specs=pl.BlockSpec((tile_n, 1), lambda i, j: (i, 0)),
            scratch_shapes=[
                pltpu.VMEM((tile_n, 1), jnp.float32),   # running max
                pltpu.VMEM((tile_n, 1), jnp.float32),   # running sum-exp
                pltpu.VMEM((tile_n, 1), jnp.float32),   # sum(x) over classes
                pltpu.VMEM((tile_n, 1), jnp.float32),   # x[target]
            ],
        ),
        compiler_params=pltpu.CompilerParams(
            dimension_semantics=("parallel", "arbitrary"),
            vmem_limit_bytes=vmem_limit,
        ),
        cost_estimate=cost,
    )(x, t2d)

    # Wrapper-side reduction: pairwise/tree sum fixes long-serial f32 accumulation,
    # and keeps the kernel's row axis fully parallel (megacore on v7x).
    return jnp.sum(per_row[:, 0]) * (1.0 / n)


def _reference(x, target, smoothing=0.1):
    confidence = 1.0 - smoothing
    logprobs = jax.nn.log_softmax(x.astype(jnp.float32), axis=-1)
    nll = -jnp.take_along_axis(logprobs, target[:, None], axis=-1)[:, 0]
    smooth = -jnp.mean(logprobs, axis=-1)
    return jnp.mean(confidence * nll + smoothing * smooth)


if __name__ == "__main__":
    key = jax.random.PRNGKey(0)
    kx, kt = jax.random.split(key)

    N, C = 20, 32  # small shapes: batch=20, num_classes=32
    x = jax.random.normal(kx, (N, C), dtype=jnp.float32)
    target = jax.random.randint(kt, (N,), 0, C, dtype=jnp.int32)

    ref = _reference(x, target, smoothing=0.1)

    # Auto tile (single full block, single class chunk).
    loss = jax.block_until_ready(label_smoothing_cross_entropy(x, target, 0.1))
    assert jnp.allclose(loss, ref, atol=1e-5, rtol=1e-5), (loss, ref)

    # Multi-row-tile path with a ragged last tile: 20 rows -> 8 + 8 + (4-valid) tiles.
    loss2 = jax.block_until_ready(
        label_smoothing_cross_entropy(x, target, 0.1, tile_n=8))
    assert jnp.allclose(loss2, ref, atol=1e-5, rtol=1e-5), (loss2, ref)

    # Native-dtype path: bf16 stays bf16 across HBM, upcast happens in-kernel.
    xb = x.astype(jnp.bfloat16)
    loss_b = jax.block_until_ready(
        label_smoothing_cross_entropy(xb, target, 0.1, tile_n=16))
    ref_b = _reference(xb, target, 0.1)
    assert jnp.allclose(loss_b, ref_b, atol=1e-4, rtol=1e-4), (loss_b, ref_b)

    # Chunked-C online-lse path with a ragged last class chunk (200 -> 128 + 72 masked).
    N2, C2 = 24, 200
    x2 = jax.random.normal(jax.random.PRNGKey(1), (N2, C2), dtype=jnp.float32)
    t2 = jax.random.randint(jax.random.PRNGKey(2), (N2,), 0, C2, dtype=jnp.int32)
    ref2 = _reference(x2, t2, 0.1)
    loss_c = jax.block_until_ready(
        label_smoothing_cross_entropy(x2, t2, 0.1, tile_n=16, chunk_c=128))
    assert jnp.allclose(loss_c, ref2, atol=1e-5, rtol=1e-5), (loss_c, ref2)

    print("KERNEL_OK")
</pallas_src>

<mosaic_0001>
module attributes {stable_mosaic.version = 11 : i64} {
  func.func @_ls_ce_kernel(%arg0: i32, %arg1: i32, %arg2: memref<20x32xf32, #tpu.memory_space<vmem>>, %arg3: memref<20x1xi32, #tpu.memory_space<vmem>>, %arg4: memref<20x1xf32, #tpu.memory_space<vmem>>, %arg5: memref<20x1xf32, #tpu.memory_space<vmem>>, %arg6: memref<20x1xf32, #tpu.memory_space<vmem>>, %arg7: memref<20x1xf32, #tpu.memory_space<vmem>>, %arg8: memref<20x1xf32, #tpu.memory_space<vmem>>) attributes {dimension_semantics = [#tpu.dimension_semantics<parallel>, #tpu.dimension_semantics<arbitrary>], iteration_bounds = array<i64: 1, 1>, scalar_prefetch = 0 : i64, scratch_operands = 4 : i64, tpu.core_type = #tpu.core_type<tc>, window_params = [{transform_indices = @transform_0, window_bounds = array<i64: 20, 32>}, {transform_indices = @transform_1, window_bounds = array<i64: 20, 1>}, {transform_indices = @transform_2, window_bounds = array<i64: 20, 1>}]} {
    %c0_i32 = arith.constant 0 : i32
    %0 = arith.cmpi eq, %arg1, %c0_i32 : i32
    %1 = arith.extui %0 : i1 to i32
    %c0_i32_0 = arith.constant 0 : i32
    %2 = arith.cmpi ne, %1, %c0_i32_0 : i32
    scf.if %2 {
      %cst_26 = arith.constant 0xFF800000 : f32
      %43 = vector.broadcast %cst_26 : f32 to vector<20x1xf32>
      %c0_27 = arith.constant 0 : index
      %c0_28 = arith.constant 0 : index
      %44 = vector.load %arg5[%c0_27, %c0_28] : memref<20x1xf32, #tpu.memory_space<vmem>>, vector<20x1xf32>
      tpu.vector_store %arg5[%c0_27, %c0_28], %43 {strides = array<i32>} : memref<20x1xf32, #tpu.memory_space<vmem>>, vector<20x1xf32>,
      %cst_29 = arith.constant 0.000000e+00 : f32
      %45 = vector.broadcast %cst_29 : f32 to vector<20x1xf32>
      %c0_30 = arith.constant 0 : index
      %c0_31 = arith.constant 0 : index
      %46 = vector.load %arg6[%c0_30, %c0_31] : memref<20x1xf32, #tpu.memory_space<vmem>>, vector<20x1xf32>
      tpu.vector_store %arg6[%c0_30, %c0_31], %45 {strides = array<i32>} : memref<20x1xf32, #tpu.memory_space<vmem>>, vector<20x1xf32>,
      %cst_32 = arith.constant 0.000000e+00 : f32
      %47 = vector.broadcast %cst_32 : f32 to vector<20x1xf32>
      %c0_33 = arith.constant 0 : index
      %c0_34 = arith.constant 0 : index
      %48 = vector.load %arg7[%c0_33, %c0_34] : memref<20x1xf32, #tpu.memory_space<vmem>>, vector<20x1xf32>
      tpu.vector_store %arg7[%c0_33, %c0_34], %47 {strides = array<i32>} : memref<20x1xf32, #tpu.memory_space<vmem>>, vector<20x1xf32>,
      %cst_35 = arith.constant 0.000000e+00 : f32
      %49 = vector.broadcast %cst_35 : f32 to vector<20x1xf32>
      %c0_36 = arith.constant 0 : index
      %c0_37 = arith.constant 0 : index
      %50 = vector.load %arg8[%c0_36, %c0_37] : memref<20x1xf32, #tpu.memory_space<vmem>>, vector<20x1xf32>
      tpu.vector_store %arg8[%c0_36, %c0_37], %49 {strides = array<i32>} : memref<20x1xf32, #tpu.memory_space<vmem>>, vector<20x1xf32>,
    } else {
    }
    %c0 = arith.constant 0 : index
    %c0_1 = arith.constant 0 : index
    %3 = vector.load %arg2[%c0, %c0_1] : memref<20x32xf32, #tpu.memory_space<vmem>>, vector<20x32xf32>
    %c0_2 = arith.constant 0 : index
    %c0_3 = arith.constant 0 : index
    %4 = vector.load %arg3[%c0_2, %c0_3] : memref<20x1xi32, #tpu.memory_space<vmem>>, vector<20x1xi32>
    %c32_i32 = arith.constant 32 : i32
    %5 = arith.muli %arg1, %c32_i32 : i32
    %6 = tpu.iota {dimensions = array<i32: 1>} : vector<1x32xi32>
    %7 = vector.broadcast %5 : i32 to vector<1x32xi32>
    %8 = arith.addi %7, %6 : vector<1x32xi32>
    %c0_4 = arith.constant 0 : index
    %c0_5 = arith.constant 0 : index
    %9 = vector.load %arg5[%c0_4, %c0_5] : memref<20x1xf32, #tpu.memory_space<vmem>>, vector<20x1xf32>
    %cst = arith.constant dense<0xFF800000> : vector<20xf32>
    %10 = vector.multi_reduction <maximumf>, %3, %cst [1] : vector<20x32xf32> to vector<20xf32>
    %11 = vector.shape_cast %10 : vector<20xf32> to vector<20x1xf32>
    %12 = arith.maximumf %9, %11 : vector<20x1xf32>
    %13 = arith.subf %9, %12 : vector<20x1xf32>
    %14 = math.exp %13 : vector<20x1xf32>
    %15 = vector.broadcast %12 : vector<20x1xf32> to vector<20x32xf32>
    %16 = arith.subf %3, %15 : vector<20x32xf32>
    %17 = math.exp %16 : vector<20x32xf32>
    %cst_6 = arith.constant dense<0.000000e+00> : vector<20xf32>
    %18 = vector.multi_reduction <add>, %17, %cst_6 [1] : vector<20x32xf32> to vector<20xf32>
    %19 = vector.shape_cast %18 : vector<20xf32> to vector<20x1xf32>
    %c0_7 = arith.constant 0 : index
    %c0_8 = arith.constant 0 : index
    %20 = vector.load %arg6[%c0_7, %c0_8] : memref<20x1xf32, #tpu.memory_space<vmem>>, vector<20x1xf32>
    %21 = arith.mulf %14, %20 : vector<20x1xf32>
    %22 = arith.addf %21, %19 : vector<20x1xf32>
    %c0_9 = arith.constant 0 : index
    %c0_10 = arith.constant 0 : index
    %23 = vector.load %arg6[%c0_9, %c0_10] : memref<20x1xf32, #tpu.memory_space<vmem>>, vector<20x1xf32>
    tpu.vector_store %arg6[%c0_9, %c0_10], %22 {strides = array<i32>} : memref<20x1xf32, #tpu.memory_space<vmem>>, vector<20x1xf32>,
    %c0_11 = arith.constant 0 : index
    %c0_12 = arith.constant 0 : index
    %24 = vector.load %arg5[%c0_11, %c0_12] : memref<20x1xf32, #tpu.memory_space<vmem>>, vector<20x1xf32>
    tpu.vector_store %arg5[%c0_11, %c0_12], %12 {strides = array<i32>} : memref<20x1xf32, #tpu.memory_space<vmem>>, vector<20x1xf32>,
    %c0_13 = arith.constant 0 : index
    %c0_14 = arith.constant 0 : index
    %25 = vector.load %arg7[%c0_13, %c0_14] : memref<20x1xf32, #tpu.memory_space<vmem>>, vector<20x1xf32>
    %cst_15 = arith.constant dense<0.000000e+00> : vector<20xf32>
    %26 = vector.multi_reduction <add>, %3, %cst_15 [1] : vector<20x32xf32> to vector<20xf32>
    %27 = vector.shape_cast %26 : vector<20xf32> to vector<20x1xf32>
    %28 = arith.addf %25, %27 : vector<20x1xf32>
    %c0_16 = arith.constant 0 : index
    %c0_17 = arith.constant 0 : index
    %29 = vector.load %arg7[%c0_16, %c0_17] : memref<20x1xf32, #tpu.memory_space<vmem>>, vector<20x1xf32>
    tpu.vector_store %arg7[%c0_16, %c0_17], %28 {strides = array<i32>} : memref<20x1xf32, #tpu.memory_space<vmem>>, vector<20x1xf32>,
    %c0_18 = arith.constant 0 : index
    %c0_19 = arith.constant 0 : index
    %30 = vector.load %arg8[%c0_18, %c0_19] : memref<20x1xf32, #tpu.memory_space<vmem>>, vector<20x1xf32>
    %31 = vector.broadcast %8 : vector<1x32xi32> to vector<20x32xi32>
    %32 = vector.broadcast %4 : vector<20x1xi32> to vector<20x32xi32>
    %33 = arith.cmpi eq, %31, %32 : vector<20x32xi32>
    %cst_20 = arith.constant 0.000000e+00 : f32
    %34 = vector.broadcast %cst_20 : f32 to vector<20x32xf32>
    %35 = arith.select %33, %3, %34 : vector<20x32xi1>, vector<20x32xf32>
    %cst_21 = arith.constant dense<0.000000e+00> : vector<20xf32>
    %36 = vector.multi_reduction <add>, %35, %cst_21 [1] : vector<20x32xf32> to vector<20xf32>
    %37 = vector.shape_cast %36 : vector<20xf32> to vector<20x1xf32>
    %38 = arith.addf %30, %37 : vector<20x1xf32>
    %c0_22 = arith.constant 0 : index
    %c0_23 = arith.constant 0 : index
    %39 = vector.load %arg8[%c0_22, %c0_23] : memref<20x1xf32, #tpu.memory_space<vmem>>, vector<20x1xf32>
    tpu.vector_store %arg8[%c0_22, %c0_23], %38 {strides = array<i32>} : memref<20x1xf32, #tpu.memory_space<vmem>>, vector<20x1xf32>,
    %c0_i32_24 = arith.constant 0 : i32
    %40 = arith.cmpi eq, %arg1, %c0_i32_24 : i32
    %41 = arith.extui %40 : i1 to i32
    %c0_i32_25 = arith.constant 0 : i32
    %42 = arith.cmpi ne, %41, %c0_i32_25 : i32
    scf.if %42 {
      %c0_26 = arith.constant 0 : index
      %c0_27 = arith.constant 0 : index
      %43 = vector.load %arg5[%c0_26, %c0_27] : memref<20x1xf32, #tpu.memory_space<vmem>>, vector<20x1xf32>
      %c0_28 = arith.constant 0 : index
      %c0_29 = arith.constant 0 : index
      %44 = vector.load %arg6[%c0_28, %c0_29] : memref<20x1xf32, #tpu.memory_space<vmem>>, vector<20x1xf32>
      %45 = math.log %44 : vector<20x1xf32>
      %46 = arith.addf %43, %45 : vector<20x1xf32>
      %c0_30 = arith.constant 0 : index
      %c0_31 = arith.constant 0 : index
      %47 = vector.load %arg8[%c0_30, %c0_31] : memref<20x1xf32, #tpu.memory_space<vmem>>, vector<20x1xf32>
      %cst_32 = arith.constant 0.899999976 : f32
      %48 = vector.broadcast %cst_32 : f32 to vector<20x1xf32>
      %49 = arith.mulf %48, %47 : vector<20x1xf32>
      %50 = arith.subf %46, %49 : vector<20x1xf32>
      %c0_33 = arith.constant 0 : index
      %c0_34 = arith.constant 0 : index
      %51 = vector.load %arg7[%c0_33, %c0_34] : memref<20x1xf32, #tpu.memory_space<vmem>>, vector<20x1xf32>
      %cst_35 = arith.constant 3.125000e-02 : f32
      %52 = vector.broadcast %cst_35 : f32 to vector<20x1xf32>
      %53 = arith.mulf %51, %52 : vector<20x1xf32>
      %cst_36 = arith.constant 1.000000e-01 : f32
      %54 = vector.broadcast %cst_36 : f32 to vector<20x1xf32>
      %55 = arith.mulf %54, %53 : vector<20x1xf32>
      %56 = arith.subf %50, %55 : vector<20x1xf32>
      %c0_37 = arith.constant 0 : index
      %c0_38 = arith.constant 0 : index
      %57 = vector.load %arg4[%c0_37, %c0_38] : memref<20x1xf32, #tpu.memory_space<vmem>>, vector<20x1xf32>
      tpu.vector_store %arg4[%c0_37, %c0_38], %56 {strides = array<i32>} : memref<20x1xf32, #tpu.memory_space<vmem>>, vector<20x1xf32>,
    } else {
    }
    return
  }
  func.func @transform_0(%arg0: i32, %arg1: i32) -> (i32, i32) {
    %c0_i32 = arith.constant 0 : i32
    return %arg0, %arg1 : i32, i32
  }
  func.func @transform_1(%arg0: i32, %arg1: i32) -> (i32, i32) {
    %c0_i32 = arith.constant 0 : i32
    %c0_i32_0 = arith.constant 0 : i32
    return %arg0, %c0_i32 : i32, i32
  }
  func.func @transform_2(%arg0: i32, %arg1: i32) -> (i32, i32) {
    %c0_i32 = arith.constant 0 : i32
    %c0_i32_0 = arith.constant 0 : i32
    return %arg0, %c0_i32 : i32, i32
  }
}

</mosaic_0001>

<llo_original>
// kernel: tpu_custom_call.1
$region0: #{tpu_custom_call.1}
  #allocation0 [shape = 'u32[]', space=smem, size = 0x4, offset = 0x4, fixed_abs, tag = 'smem constant byte address 0x4 - core index']
  #allocation1 [shape = 'u32[144,128]{1,0:T(1,128)}', space=vmem, size = 0x12000, scoped, tag = 'internal scratch']
  #allocation2 [shape = 'f32[20,1]{1,0:T(8,128)}', space=vmem, size = 0x3000, scoped, tag = 'scratch operand']
  #allocation3 [shape = 'f32[20,1]{1,0:T(8,128)}', space=vmem, size = 0x3000, scoped, tag = 'scratch operand']
  #allocation4 [shape = 'f32[20,1]{1,0:T(8,128)}', space=vmem, size = 0x3000, scoped, tag = 'scratch operand']
  #allocation5 [shape = 'f32[20,1]{1,0:T(8,128)}', space=vmem, size = 0x3000, scoped, tag = 'scratch operand']
  %s0 = inlined_call_operand.vmem [shape: f32[20,32], index: 0, kind: input, shape index: {}]
  %s1 = inlined_call_operand.vmem [shape: s32[20,1], index: 1, kind: input, shape index: {}]
  %s2 = inlined_call_operand.vmem [shape: f32[20,1], index: 2, kind: output, shape index: {}]
  %s3 = sld [smem:[#allocation0]]
  $region26: #{tpu_custom_call.1} parent=0
    _
  %s5 = ssub.s32 1, %s3
  %s6 = scalar_select 0, %s5, %s3
  // Predicated region
  $region2: #{tpu_custom_call.1} parent=0 // pred_check
    _
  $region3: #{tpu_custom_call.1} parent=0 // pred_check_branch
    %8 = sbr.rel (0) target = $region5
  $region4: #{tpu_custom_call.1} parent=0 // pred_region
    _
  $region5: #{tpu_custom_call.1} parent=0 // pred_fallthru
    _
  // Predicated region
  $region6: #{tpu_custom_call.1} parent=0 // pred_check
    _
  $region7: #{tpu_custom_call.1} parent=0 // pred_check_branch
    %10 = sbr.rel (0) target = $region9
  $region8: #{tpu_custom_call.1} parent=0 // pred_region
    _
  $region9: #{tpu_custom_call.1} parent=0 // pred_fallthru
    _
  %p11 = scmp.eq.s32.totalorder 0, 0
  // Predicated region
  $region10: #{tpu_custom_call.1} parent=0 // pred_check
    %p12 = pneg %p11
  $region11: #{tpu_custom_call.1} parent=0 // pred_check_branch
    %14 = sbr.rel (%p12) target = $region13
  $region12: #{tpu_custom_call.1} parent=0 // pred_region
    %vm15 = vcmask 7168
    %16 = vst.msk [vmem:[#allocation2] sm:$0xff] %vm15, -inf
    %17 = vst.msk [vmem:[#allocation2 + $0x8] sm:$0xff] %vm15, -inf
    %vm18 = vcmask 3072
    %19 = vst.msk [vmem:[#allocation2 + $0x10] sm:$0xf] %vm18, -inf
    %20 = vst.msk [vmem:[#allocation3] sm:$0xff] %vm15, 0.0
    %21 = vst.msk [vmem:[#allocation3 + $0x8] sm:$0xff] %vm15, 0.0
    %22 = vst.msk [vmem:[#allocation3 + $0x10] sm:$0xf] %vm18, 0.0
    %23 = vst.msk [vmem:[#allocation4] sm:$0xff] %vm15, 0.0
    %24 = vst.msk [vmem:[#allocation4 + $0x8] sm:$0xff] %vm15, 0.0
    %25 = vst.msk [vmem:[#allocation4 + $0x10] sm:$0xf] %vm18, 0.0
    %26 = vst.msk [vmem:[#allocation5] sm:$0xff] %vm15, 0.0
    %27 = vst.msk [vmem:[#allocation5 + $0x8] sm:$0xff] %vm15, 0.0
    %28 = vst.msk [vmem:[#allocation5 + $0x10] sm:$0xf] %vm18, 0.0
  $region13: #{tpu_custom_call.1} parent=0 // pred_fallthru
    _
  %v29 = vld [vmem:[%s0] sm:$0xff]
  %v30 = vld [vmem:[%s0 + $0x8] sm:$0xff]
  %v31 = vld [vmem:[%s0 + $0x10] sm:$0xf]
  %v32 = vld [vmem:[%s1] sm:$0xff]
  %v33 = vld [vmem:[%s1 + $0x8] sm:$0xff]
  %v34 = vld [vmem:[%s1 + $0x10] sm:$0xf]
  %s35 = smul.u32 0, 32
  %v36 = vlaneseq
  %v37 = vand.u32 %v36, 127
  %v38 = vstv %s35
  %v39 = vadd.s32 %v38, %v37
  %v40 = vld [vmem:[#allocation2] sm:$0xff]
  %v41 = vld [vmem:[#allocation2 + $0x8] sm:$0xff]
  %v42 = vld [vmem:[#allocation2 + $0x10] sm:$0xf]
  %vm43 = vcmask 261120
  %v44 = vsel %vm43, %v29, -inf
  %45 = vmax.xlane.f32.xlu0 %v44
  %v46 = vpop.xlane.xlu0 %45
  %v47 = vsel %vm43, %v30, -inf
  %48 = vmax.xlane.f32.xlu0 %v47
  %v49 = vpop.xlane.xlu0 %48
  %vm50 = vcmask 257024
  %v51 = vsel %vm50, %v31, -inf
  %52 = vmax.xlane.f32.xlu0 %v51
  %v53 = vpop.xlane.xlu0 %52
  %v54 = vmax.f32 %v40, %v46
  %v55 = vmax.f32 %v41, %v49
  %v56 = vmax.f32 %v42, %v53
  %v57 = vsub.f32 %v40, %v54
  %v58 = vsub.f32 %v41, %v55
  %v59 = vsub.f32 %v42, %v56
  %v60 = vmul.f32 %v57, 1.442695
  %v61 = vpow.pop %v60
  %v62 = vmul.f32 %v58, 1.442695
  %v63 = vpow.pop %v62
  %v64 = vmul.f32 %v59, 1.442695
  %v65 = vpow.pop %v64
  %67 = vset.pattern.permute.xlu0 0
  %68 = vperm.xlu0 %67, %v54
  %v69 = vpop.permute.xlu0 %68
  %72 = vset.pattern.permute.xlu0 0
  %73 = vperm.xlu0 %72, %v55
  %v74 = vpop.permute.xlu0 %73
  %77 = vset.pattern.permute.xlu0 0
  %78 = vperm.xlu0 %77, %v56
  %v79 = vpop.permute.xlu0 %78
  %v81 = vsub.f32 %v29, %v69
  %v82 = vsub.f32 %v30, %v74
  %v83 = vsub.f32 %v31, %v79
  %v84 = vmul.f32 %v81, 1.442695
  %v85 = vpow.pop %v84
  %v86 = vmul.f32 %v82, 1.442695
  %v87 = vpow.pop %v86
  %v88 = vmul.f32 %v83, 1.442695
  %v89 = vpow.pop %v88
  %v90 = vsel %vm43, %v85, 0.0
  %91 = vadd.xlane.f32.xlu0 %v90
  %v92 = vpop.xlane.xlu0 %91
  %v93 = vsel %vm43, %v87, 0.0
  %94 = vadd.xlane.f32.xlu0 %v93
  %v95 = vpop.xlane.xlu0 %94
  %v96 = vsel %vm50, %v89, 0.0
  %97 = vadd.xlane.f32.xlu0 %v96
  %v98 = vpop.xlane.xlu0 %97
  %v99 = vld [vmem:[#allocation3] sm:$0xff]
  %v100 = vld [vmem:[#allocation3 + $0x8] sm:$0xff]
  %v101 = vld [vmem:[#allocation3 + $0x10] sm:$0xf]
  %v102 = vmul.f32 %v61, %v99
  %v103 = vmul.f32 %v63, %v100
  %v104 = vmul.f32 %v65, %v101
  %v105 = vadd.f32 %v102, %v92
  %v106 = vadd.f32 %v103, %v95
  %v107 = vadd.f32 %v104, %v98
  %vm108 = vcmask 7168
  %109 = vst.msk [vmem:[#allocation3] sm:$0xff] %vm108, %v105
  %110 = vst.msk [vmem:[#allocation3 + $0x8] sm:$0xff] %vm108, %v106
  %vm111 = vcmask 3072
  %112 = vst.msk [vmem:[#allocation3 + $0x10] sm:$0xf] %vm111, %v107
  %113 = vst.msk [vmem:[#allocation2] sm:$0xff] %vm108, %v54
  %114 = vst.msk [vmem:[#allocation2 + $0x8] sm:$0xff] %vm108, %v55
  %115 = vst.msk [vmem:[#allocation2 + $0x10] sm:$0xf] %vm111, %v56
  %v116 = vld [vmem:[#allocation4] sm:$0xff]
  %v117 = vld [vmem:[#allocation4 + $0x8] sm:$0xff]
  %v118 = vld [vmem:[#allocation4 + $0x10] sm:$0xf]
  %v119 = vsel %vm43, %v29, 0.0
  %120 = vadd.xlane.f32.xlu0 %v119
  %v121 = vpop.xlane.xlu0 %120
  %v122 = vsel %vm43, %v30, 0.0
  %123 = vadd.xlane.f32.xlu0 %v122
  %v124 = vpop.xlane.xlu0 %123
  %v125 = vsel %vm50, %v31, 0.0
  %126 = vadd.xlane.f32.xlu0 %v125
  %v127 = vpop.xlane.xlu0 %126
  %v128 = vadd.f32 %v116, %v121
  %v129 = vadd.f32 %v117, %v124
  %v130 = vadd.f32 %v118, %v127
  %131 = vst.msk [vmem:[#allocation4] sm:$0xff] %vm108, %v128
  %132 = vst.msk [vmem:[#allocation4 + $0x8] sm:$0xff] %vm108, %v129
  %133 = vst.msk [vmem:[#allocation4 + $0x10] sm:$0xf] %vm111, %v130
  %v134 = vld [vmem:[#allocation5] sm:$0xff]
  %v135 = vld [vmem:[#allocation5 + $0x8] sm:$0xff]
  %v136 = vld [vmem:[#allocation5 + $0x10] sm:$0xf]
  %137 = vset.pattern.permute.xlu0 0
  %138 = vperm.xlu0 %137, %v32
  %v139 = vpop.permute.xlu0 %138
  %140 = vset.pattern.permute.xlu0 0
  %141 = vperm.xlu0 %140, %v33
  %v142 = vpop.permute.xlu0 %141
  %143 = vset.pattern.permute.xlu0 0
  %144 = vperm.xlu0 %143, %v34
  %v145 = vpop.permute.xlu0 %144
  %vm146 = vcmp.eq.s32.totalorder %v39, %v139
  %vm147 = vcmp.eq.s32.totalorder %v39, %v142
  %vm148 = vcmp.eq.s32.totalorder %v39, %v145
  %v149 = vsel %vm146, %v29, 0.0
  %v150 = vsel %vm147, %v30, 0.0
  %v151 = vsel %vm148, %v31, 0.0
  %v152 = vsel %vm43, %v149, 0.0
  %153 = vadd.xlane.f32.xlu0 %v152
  %v154 = vpop.xlane.xlu0 %153
  %v155 = vsel %vm43, %v150, 0.0
  %156 = vadd.xlane.f32.xlu0 %v155
  %v157 = vpop.xlane.xlu0 %156
  %v158 = vsel %vm50, %v151, 0.0
  %159 = vadd.xlane.f32.xlu0 %v158
  %v160 = vpop.xlane.xlu0 %159
  %v161 = vadd.f32 %v134, %v154
  %v162 = vadd.f32 %v135, %v157
  %v163 = vadd.f32 %v136, %v160
  %164 = vst.msk [vmem:[#allocation5] sm:$0xff] %vm108, %v161
  %165 = vst.msk [vmem:[#allocation5 + $0x8] sm:$0xff] %vm108, %v162
  %166 = vst.msk [vmem:[#allocation5 + $0x10] sm:$0xf] %vm111, %v163
  // Predicated region
  $region14: #{tpu_custom_call.1} parent=0 // pred_check
    %p167 = pneg %p11
  $region15: #{tpu_custom_call.1} parent=0 // pred_check_branch
    %169 = sbr.rel (%p167) target = $region17
  $region16: #{tpu_custom_call.1} parent=0 // pred_region
    %v170 = vld [vmem:[#allocation2] sm:$0xff]
    %v171 = vld [vmem:[#allocation2 + $0x8] sm:$0xff]
    %v172 = vld [vmem:[#allocation2 + $0x10] sm:$0xf]
    %v173 = vld [vmem:[#allocation3] sm:$0xff]
    %v174 = vld [vmem:[#allocation3 + $0x8] sm:$0xff]
    %v175 = vld [vmem:[#allocation3 + $0x10] sm:$0xf]
    %v176 = vlog2.pop %v173
    %v177 = vmul.f32 %v176, 0.6931472
    %v178 = vlog2.pop %v174
    %v179 = vmul.f32 %v178, 0.6931472
    %v180 = vlog2.pop %v175
    %v181 = vmul.f32 %v180, 0.6931472
    %v182 = vadd.f32 %v170, %v177
    %v183 = vadd.f32 %v171, %v179
    %v184 = vadd.f32 %v172, %v181
    %v185 = vld [vmem:[#allocation5] sm:$0xff]
    %v186 = vld [vmem:[#allocation5 + $0x8] sm:$0xff]
    %v187 = vld [vmem:[#allocation5 + $0x10] sm:$0xf]
    %v188 = vmul.f32 %v185, 0.9
    %v189 = vmul.f32 %v186, 0.9
    %v190 = vmul.f32 %v187, 0.9
    %v191 = vsub.f32 %v182, %v188
    %v192 = vsub.f32 %v183, %v189
    %v193 = vsub.f32 %v184, %v190
    %v194 = vld [vmem:[#allocation4] sm:$0xff]
    %v195 = vld [vmem:[#allocation4 + $0x8] sm:$0xff]
    %v196 = vld [vmem:[#allocation4 + $0x10] sm:$0xf]
    %v197 = vmul.f32 %v194, 0.03125
    %v198 = vmul.f32 %v195, 0.03125
    %v199 = vmul.f32 %v196, 0.03125
    %v200 = vmul.f32 %v197, 0.1
    %v201 = vmul.f32 %v198, 0.1
    %v202 = vmul.f32 %v199, 0.1
    %v203 = vsub.f32 %v191, %v200
    %v204 = vsub.f32 %v192, %v201
    %v205 = vsub.f32 %v193, %v202
    %206 = vst.msk [vmem:[%s2] sm:$0xff] %vm108, %v203
    %207 = vst.msk [vmem:[%s2 + $0x8] sm:$0xff] %vm108, %v204
    %208 = vst.msk [vmem:[%s2 + $0x10] sm:$0xf] %vm111, %v205
  $region17: #{tpu_custom_call.1} parent=0 // pred_fallthru
    _
  // Predicated region
  $region18: #{tpu_custom_call.1} parent=0 // pred_check
    _
  $region19: #{tpu_custom_call.1} parent=0 // pred_check_branch
    %210 = sbr.rel (0) target = $region21
  $region20: #{tpu_custom_call.1} parent=0 // pred_region
    _
  $region21: #{tpu_custom_call.1} parent=0 // pred_fallthru
    _
  // Predicated region
  $region22: #{tpu_custom_call.1} parent=0 // pred_check
    _
  $region23: #{tpu_custom_call.1} parent=0 // pred_check_branch
    %212 = sbr.rel (0) target = $region25
  $region24: #{tpu_custom_call.1} parent=0 // pred_region
    _
  $region25: #{tpu_custom_call.1} parent=0 // pred_fallthru
    _

</llo_original>
